<compile_context>
chip_gen: v7x
topology: tpu7x:2x2x1
jax: 0.10.0
libtpu: 0.0.40
codegen_flags: <defaults>
</compile_context>

<pallas_src>
import functools

import jax
import jax.numpy as jnp
from jax import lax
from jax.experimental import pallas as pl
from jax.experimental.pallas import tpu as pltpu


def _round_up(x, m):
    return ((x + m - 1) // m) * m


def _ib_focal_kernel(x_ref, t_ref, f_ref, out_ref, *, transpose_in_kernel,
                     n_total, block_n, num_classes, alpha, gamma, epsilon):
    x = x_ref[...].astype(jnp.float32)
    if transpose_in_kernel:
        # (block_n, C) tile -> (C, block_n): samples on the 128-wide lane axis,
        # classes on sublanes.  Rides the XLU; no HBM-level relayout needed.
        x = jnp.transpose(x)
    tgt = t_ref[...]                              # (1, bn) int32 targets
    feat = f_ref[...].astype(jnp.float32)         # (1, bn) features

    # Mask lanes past the true N in the (possibly padded) last block.
    col = (lax.broadcasted_iota(jnp.int32, (1, block_n), 1)
           + pl.program_id(0) * block_n)
    valid = col < n_total                         # (1, bn) bool

    cls = lax.broadcasted_iota(jnp.int32, (num_classes, block_n), 0)
    onehot = cls == tgt                           # (C, bn) bool, never cast to f32

    # Log-sum-exp over the class (sublane) axis.
    cmax = jnp.max(x, axis=0, keepdims=True)      # (1, bn)
    ex = jnp.exp(x - cmax)                        # (C, bn)   (EUP)
    denom = jnp.sum(ex, axis=0, keepdims=True)    # (1, bn), >= 1
    picked_ex = jnp.sum(jnp.where(onehot, ex, 0.0), axis=0, keepdims=True)
    picked_x = jnp.sum(jnp.where(onehot, x, 0.0), axis=0, keepdims=True)

    # p = softmax[target] (== exp(-ce)); reuse the exp numerator, no extra exp.
    p = picked_ex / denom
    one_minus_p = jnp.maximum(1.0 - p, 0.0)       # clamp fp overshoot (NaN fix)

    # grads = sum_c |softmax_c - onehot_c| == 2*(1-p) exactly; softmax itself
    # is never materialized (no (C,bn) normalize / select / extra reduce).
    grads = 2.0 * one_minus_p

    # Per-sample cross entropy: logsumexp(x) - x[target].
    # TODO(synk): per-class `weight=` of F.cross_entropy not implemented
    # (module default is weight=None).
    ce = cmax + jnp.log(denom) - picked_x         # (1, bn)
    ib = alpha / (grads * feat + epsilon)         # (1, bn)

    if gamma == 0.0:
        loss = ce * ib                            # (1-p)**0 == 1 (torch 0**0 == 1)
    elif float(gamma).is_integer() and 0.0 < gamma <= 8.0:
        focal = one_minus_p                       # integer pow: VPU multiplies only
        for _ in range(int(gamma) - 1):
            focal = focal * one_minus_p
        loss = focal * ce * ib
    else:
        focal = jnp.where(
            one_minus_p > 0.0,
            jnp.exp(gamma * jnp.log(jnp.maximum(one_minus_p, 1e-38))),
            0.0)
        loss = focal * ce * ib

    partial = jnp.sum(jnp.where(valid, loss, 0.0))    # scalar partial sum

    # Full-tile (8, 128) unmasked store: partial sum at [0, 0], zeros elsewhere.
    r = lax.broadcasted_iota(jnp.int32, (8, 128), 0)
    l = lax.broadcasted_iota(jnp.int32, (8, 128), 1)
    out_ref[...] = jnp.where((r == 0) & (l == 0), partial, jnp.float32(0.0))


def _pick_block_n(n, c, itemsize):
    """Samples per grid step: as large as fits a conservative VMEM budget."""
    lanes_in = _round_up(c, 128)                  # VMEM lane image of the (bn, C) tile
    sub_c = _round_up(c, 8)
    # double-buffered native-dtype input tile + ~4 live f32 (C, bn)
    # intermediates + lane-dense per-sample rows.
    per_sample = 2 * lanes_in * itemsize + 4 * sub_c * 4 + 64
    budget = 16 * 1024 * 1024                     # fits v7x's 32 MiB scoped VMEM
    bn = max(128, min(budget // per_sample, 16384))
    bn = (bn // 128) * 128
    bn = min(bn, _round_up(n, 128))               # never bigger than needed
    if n > 128:                                   # keep grid >= 2 (v7x megacore)
        bn = min(bn, _round_up(pl.cdiv(n, 2), 128))
    return max(128, bn)


def _build_call(n, c, block_n, grid, in_dtype, transpose_in_kernel, kernel_kw):
    kernel = functools.partial(_ib_focal_kernel,
                               transpose_in_kernel=transpose_in_kernel,
                               n_total=n, block_n=block_n, num_classes=c,
                               **kernel_kw)
    if transpose_in_kernel:      # logits arrive (N, C); tile transposed in-kernel
        x_spec = pl.BlockSpec((block_n, c), lambda i: (i, 0))
    else:                        # fallback path: logits arrive pre-transposed (C, N)
        x_spec = pl.BlockSpec((c, block_n), lambda i: (0, i))

    bytes_in = n * c * jnp.dtype(in_dtype).itemsize + 8 * n
    cost = pl.CostEstimate(
        flops=10 * n * c,
        transcendentals=n * c + 2 * n,
        bytes_accessed=bytes_in + grid * 8 * 128 * 4)

    return pl.pallas_call(
        kernel,
        out_shape=jax.ShapeDtypeStruct((8, grid * 128), jnp.float32),
        grid=(grid,),
        in_specs=[
            x_spec,
            pl.BlockSpec((1, block_n), lambda i: (0, i)),   # targets  (1, N)
            pl.BlockSpec((1, block_n), lambda i: (0, i)),   # features (1, N)
        ],
        out_specs=pl.BlockSpec((8, 128), lambda i: (0, i)),
        compiler_params=pltpu.CompilerParams(
            dimension_semantics=("parallel",),
            vmem_limit_bytes=32 * 1024 * 1024),
        cost_estimate=cost,
    )


def ib_focal_loss(logits, target, features, *, alpha=10000.0, gamma=0.0,
                  epsilon=1e-3, block_n=None):
    """logits: (N, C) float (any float dtype), target: (N,) int,
    features: (N,) or (N, 1) float  ->  scalar loss."""
    n, c = logits.shape
    if block_n is None:
        block_n = _pick_block_n(n, c, logits.dtype.itemsize)
    else:
        block_n = max(128, _round_up(min(block_n, _round_up(n, 128)), 128))
    grid = pl.cdiv(n, block_n)

    tgt = target.astype(jnp.int32).reshape(1, n)        # lane-dense targets
    feat = features.astype(jnp.float32).reshape(1, n)   # lane-dense features
    kernel_kw = dict(alpha=float(alpha), gamma=float(gamma),
                     epsilon=float(epsilon))

    try:
        call = _build_call(n, c, block_n, grid, logits.dtype, True, kernel_kw)
        partials = call(logits, tgt, feat)
    except Exception:
        # Safety net: if this Mosaic build cannot lower the in-kernel transpose
        # of a (block_n, C) tile with unaligned C, pay one wrapper-level
        # relayout of the logits instead (previous, known-good layout).
        call = _build_call(n, c, block_n, grid, logits.dtype, False, kernel_kw)
        partials = call(jnp.transpose(logits), tgt, feat)

    return jnp.sum(partials) / jnp.float32(n)


def _reference(logits, target, features, *, alpha=10000.0, gamma=0.0,
               epsilon=1e-3):
    """Pure-JAX mirror of the PyTorch module."""
    n, c = logits.shape
    x = logits.astype(jnp.float32)
    sm = jax.nn.softmax(x, axis=1)
    onehot = jax.nn.one_hot(target, c, dtype=jnp.float32)
    grads = jnp.sum(jnp.abs(sm - onehot), axis=1)
    ib = alpha / (grads * features.reshape(-1).astype(jnp.float32) + epsilon)
    lse = jax.scipy.special.logsumexp(x, axis=1)
    ce = lse - x[jnp.arange(n), target]
    p = jnp.exp(-ce)
    return jnp.mean((1.0 - p) ** gamma * ce * ib)


if __name__ == "__main__":
    key = jax.random.PRNGKey(0)
    # N deliberately NOT a multiple of 128 (exercises lane masking + 2-step
    # grid); two class counts exercise the odd-C in-kernel transpose.
    for (N, C) in ((200, 10), (1000, 37)):
        k1, k2, k3 = jax.random.split(jax.random.fold_in(key, N), 3)
        logits = jax.random.normal(k1, (N, C), dtype=jnp.float32)
        target = jax.random.randint(k2, (N,), 0, C, dtype=jnp.int32)
        features = jax.random.uniform(k3, (N, 1), dtype=jnp.float32,
                                      minval=0.5, maxval=1.5)
        for gamma in (0.0, 2.0, 1.5):   # module default, integer focal, general
            loss = ib_focal_loss(logits, target, features, gamma=gamma)
            jax.block_until_ready(loss)
            ref = _reference(logits, target, features, gamma=gamma)
            assert jnp.allclose(loss, ref, rtol=1e-3, atol=1e-3), (
                N, C, gamma, loss, ref)
    print("KERNEL_OK")
</pallas_src>

<mosaic_0001>
module attributes {stable_mosaic.version = 11 : i64} {
  func.func @_ib_focal_kernel(%arg0: i32, %arg1: memref<128x10xf32, #tpu.memory_space<vmem>>, %arg2: memref<1x128xi32, #tpu.memory_space<vmem>>, %arg3: memref<1x128xf32, #tpu.memory_space<vmem>>, %arg4: memref<8x128xf32, #tpu.memory_space<vmem>>) attributes {dimension_semantics = [#tpu.dimension_semantics<parallel>], iteration_bounds = array<i64: 2>, scalar_prefetch = 0 : i64, scratch_operands = 0 : i64, tpu.core_type = #tpu.core_type<tc>, window_params = [{transform_indices = @transform_0, window_bounds = array<i64: 128, 10>}, {transform_indices = @transform_1, window_bounds = array<i64: 1, 128>}, {transform_indices = @transform_2, window_bounds = array<i64: 1, 128>}, {transform_indices = @transform_3, window_bounds = array<i64: 8, 128>}]} {
    %c0 = arith.constant 0 : index
    %c0_0 = arith.constant 0 : index
    %0 = vector.load %arg1[%c0, %c0_0] : memref<128x10xf32, #tpu.memory_space<vmem>>, vector<128x10xf32>
    %1 = tpu.transpose %0, [1, 0] : vector<128x10xf32> -> vector<10x128xf32>
    %c0_1 = arith.constant 0 : index
    %c0_2 = arith.constant 0 : index
    %2 = vector.load %arg2[%c0_1, %c0_2] : memref<1x128xi32, #tpu.memory_space<vmem>>, vector<1x128xi32>
    %c0_3 = arith.constant 0 : index
    %c0_4 = arith.constant 0 : index
    %3 = vector.load %arg3[%c0_3, %c0_4] : memref<1x128xf32, #tpu.memory_space<vmem>>, vector<1x128xf32>
    %4 = tpu.iota {dimensions = array<i32: 1>} : vector<1x128xi32>
    %c128_i32 = arith.constant 128 : i32
    %5 = arith.muli %arg0, %c128_i32 : i32
    %6 = vector.broadcast %5 : i32 to vector<1x128xi32>
    %7 = arith.addi %4, %6 : vector<1x128xi32>
    %c200_i32 = arith.constant 200 : i32
    %8 = vector.broadcast %c200_i32 : i32 to vector<1x128xi32>
    %9 = arith.cmpi slt, %7, %8 : vector<1x128xi32>
    %10 = tpu.iota {dimensions = array<i32: 0>} : vector<10x128xi32>
    %11 = vector.broadcast %2 : vector<1x128xi32> to vector<10x128xi32>
    %12 = arith.cmpi eq, %10, %11 : vector<10x128xi32>
    %cst = arith.constant dense<0xFF800000> : vector<128xf32>
    %13 = vector.multi_reduction <maximumf>, %1, %cst [0] : vector<10x128xf32> to vector<128xf32>
    %14 = vector.shape_cast %13 : vector<128xf32> to vector<1x128xf32>
    %15 = vector.broadcast %14 : vector<1x128xf32> to vector<10x128xf32>
    %16 = arith.subf %1, %15 : vector<10x128xf32>
    %17 = math.exp %16 : vector<10x128xf32>
    %cst_5 = arith.constant dense<0.000000e+00> : vector<128xf32>
    %18 = vector.multi_reduction <add>, %17, %cst_5 [0] : vector<10x128xf32> to vector<128xf32>
    %19 = vector.shape_cast %18 : vector<128xf32> to vector<1x128xf32>
    %cst_6 = arith.constant 0.000000e+00 : f32
    %20 = vector.broadcast %cst_6 : f32 to vector<10x128xf32>
    %21 = arith.select %12, %17, %20 : vector<10x128xi1>, vector<10x128xf32>
    %cst_7 = arith.constant dense<0.000000e+00> : vector<128xf32>
    %22 = vector.multi_reduction <add>, %21, %cst_7 [0] : vector<10x128xf32> to vector<128xf32>
    %23 = vector.shape_cast %22 : vector<128xf32> to vector<1x128xf32>
    %cst_8 = arith.constant 0.000000e+00 : f32
    %24 = vector.broadcast %cst_8 : f32 to vector<10x128xf32>
    %25 = arith.select %12, %1, %24 : vector<10x128xi1>, vector<10x128xf32>
    %cst_9 = arith.constant dense<0.000000e+00> : vector<128xf32>
    %26 = vector.multi_reduction <add>, %25, %cst_9 [0] : vector<10x128xf32> to vector<128xf32>
    %27 = vector.shape_cast %26 : vector<128xf32> to vector<1x128xf32>
    %28 = arith.divf %23, %19 : vector<1x128xf32>
    %cst_10 = arith.constant 1.000000e+00 : f32
    %29 = vector.broadcast %cst_10 : f32 to vector<1x128xf32>
    %30 = arith.subf %29, %28 : vector<1x128xf32>
    %cst_11 = arith.constant 0.000000e+00 : f32
    %31 = vector.broadcast %cst_11 : f32 to vector<1x128xf32>
    %32 = arith.maximumf %30, %31 : vector<1x128xf32>
    %cst_12 = arith.constant 2.000000e+00 : f32
    %33 = vector.broadcast %cst_12 : f32 to vector<1x128xf32>
    %34 = arith.mulf %33, %32 : vector<1x128xf32>
    %35 = math.log %19 : vector<1x128xf32>
    %36 = arith.addf %14, %35 : vector<1x128xf32>
    %37 = arith.subf %36, %27 : vector<1x128xf32>
    %38 = arith.mulf %34, %3 : vector<1x128xf32>
    %cst_13 = arith.constant 1.000000e-03 : f32
    %39 = vector.broadcast %cst_13 : f32 to vector<1x128xf32>
    %40 = arith.addf %38, %39 : vector<1x128xf32>
    %cst_14 = arith.constant 1.000000e+04 : f32
    %41 = vector.broadcast %cst_14 : f32 to vector<1x128xf32>
    %42 = arith.divf %41, %40 : vector<1x128xf32>
    %43 = arith.mulf %37, %42 : vector<1x128xf32>
    %cst_15 = arith.constant 0.000000e+00 : f32
    %44 = vector.broadcast %cst_15 : f32 to vector<1x128xf32>
    %45 = arith.select %9, %43, %44 : vector<1x128xi1>, vector<1x128xf32>
    %46 = vector.shape_cast %45 : vector<1x128xf32> to vector<1x1x128xf32>
    %cst_16 = arith.constant dense<0.000000e+00> : vector<1xf32>
    %47 = vector.multi_reduction <add>, %46, %cst_16 [1, 2] : vector<1x1x128xf32> to vector<1xf32>
    %48 = vector.shape_cast %47 : vector<1xf32> to vector<1x1x1xf32>
    %49 = vector.extract %48[0, 0, 0] : f32 from vector<1x1x1xf32>
    %50 = tpu.iota {dimensions = array<i32: 0>} : vector<8x128xi32>
    %51 = tpu.iota {dimensions = array<i32: 1>} : vector<8x128xi32>
    %c0_i32 = arith.constant 0 : i32
    %52 = vector.broadcast %c0_i32 : i32 to vector<8x128xi32>
    %53 = arith.cmpi eq, %50, %52 : vector<8x128xi32>
    %c0_i32_17 = arith.constant 0 : i32
    %54 = vector.broadcast %c0_i32_17 : i32 to vector<8x128xi32>
    %55 = arith.cmpi eq, %51, %54 : vector<8x128xi32>
    %56 = arith.andi %53, %55 : vector<8x128xi1>
    %cst_18 = arith.constant 0.000000e+00 : f32
    %57 = vector.broadcast %49 : f32 to vector<8x128xf32>
    %58 = vector.broadcast %cst_18 : f32 to vector<8x128xf32>
    %59 = arith.select %56, %57, %58 : vector<8x128xi1>, vector<8x128xf32>
    %c0_19 = arith.constant 0 : index
    %c0_20 = arith.constant 0 : index
    %60 = vector.load %arg4[%c0_19, %c0_20] : memref<8x128xf32, #tpu.memory_space<vmem>>, vector<8x128xf32>
    tpu.vector_store %arg4[%c0_19, %c0_20], %59 {strides = array<i32>} : memref<8x128xf32, #tpu.memory_space<vmem>>, vector<8x128xf32>,
    return
  }
  func.func @transform_0(%arg0: i32) -> (i32, i32) {
    %c0_i32 = arith.constant 0 : i32
    %c0_i32_0 = arith.constant 0 : i32
    return %arg0, %c0_i32 : i32, i32
  }
  func.func @transform_1(%arg0: i32) -> (i32, i32) {
    %c0_i32 = arith.constant 0 : i32
    %c0_i32_0 = arith.constant 0 : i32
    return %c0_i32, %arg0 : i32, i32
  }
  func.func @transform_2(%arg0: i32) -> (i32, i32) {
    %c0_i32 = arith.constant 0 : i32
    %c0_i32_0 = arith.constant 0 : i32
    return %c0_i32, %arg0 : i32, i32
  }
  func.func @transform_3(%arg0: i32) -> (i32, i32) {
    %c0_i32 = arith.constant 0 : i32
    %c0_i32_0 = arith.constant 0 : i32
    return %c0_i32, %arg0 : i32, i32
  }
}

module attributes {stable_mosaic.version = 11 : i64} {
  func.func @_ib_focal_kernel(%arg0: i32, %arg1: memref<10x128xf32, #tpu.memory_space<vmem>>, %arg2: memref<1x128xi32, #tpu.memory_space<vmem>>, %arg3: memref<1x128xf32, #tpu.memory_space<vmem>>, %arg4: memref<8x128xf32, #tpu.memory_space<vmem>>) attributes {dimension_semantics = [#tpu.dimension_semantics<parallel>], iteration_bounds = array<i64: 2>, scalar_prefetch = 0 : i64, scratch_operands = 0 : i64, tpu.core_type = #tpu.core_type<tc>, window_params = [{transform_indices = @transform_0, window_bounds = array<i64: 10, 128>}, {transform_indices = @transform_1, window_bounds = array<i64: 1, 128>}, {transform_indices = @transform_2, window_bounds = array<i64: 1, 128>}, {transform_indices = @transform_3, window_bounds = array<i64: 8, 128>}]} {
    %c0 = arith.constant 0 : index
    %c0_0 = arith.constant 0 : index
    %0 = vector.load %arg1[%c0, %c0_0] : memref<10x128xf32, #tpu.memory_space<vmem>>, vector<10x128xf32>
    %c0_1 = arith.constant 0 : index
    %c0_2 = arith.constant 0 : index
    %1 = vector.load %arg2[%c0_1, %c0_2] : memref<1x128xi32, #tpu.memory_space<vmem>>, vector<1x128xi32>
    %c0_3 = arith.constant 0 : index
    %c0_4 = arith.constant 0 : index
    %2 = vector.load %arg3[%c0_3, %c0_4] : memref<1x128xf32, #tpu.memory_space<vmem>>, vector<1x128xf32>
    %3 = tpu.iota {dimensions = array<i32: 1>} : vector<1x128xi32>
    %c128_i32 = arith.constant 128 : i32
    %4 = arith.muli %arg0, %c128_i32 : i32
    %5 = vector.broadcast %4 : i32 to vector<1x128xi32>
    %6 = arith.addi %3, %5 : vector<1x128xi32>
    %c200_i32 = arith.constant 200 : i32
    %7 = vector.broadcast %c200_i32 : i32 to vector<1x128xi32>
    %8 = arith.cmpi slt, %6, %7 : vector<1x128xi32>
    %9 = tpu.iota {dimensions = array<i32: 0>} : vector<10x128xi32>
    %10 = vector.broadcast %1 : vector<1x128xi32> to vector<10x128xi32>
    %11 = arith.cmpi eq, %9, %10 : vector<10x128xi32>
    %cst = arith.constant dense<0xFF800000> : vector<128xf32>
    %12 = vector.multi_reduction <maximumf>, %0, %cst [0] : vector<10x128xf32> to vector<128xf32>
    %13 = vector.shape_cast %12 : vector<128xf32> to vector<1x128xf32>
    %14 = vector.broadcast %13 : vector<1x128xf32> to vector<10x128xf32>
    %15 = arith.subf %0, %14 : vector<10x128xf32>
    %16 = math.exp %15 : vector<10x128xf32>
    %cst_5 = arith.constant dense<0.000000e+00> : vector<128xf32>
    %17 = vector.multi_reduction <add>, %16, %cst_5 [0] : vector<10x128xf32> to vector<128xf32>
    %18 = vector.shape_cast %17 : vector<128xf32> to vector<1x128xf32>
    %cst_6 = arith.constant 0.000000e+00 : f32
    %19 = vector.broadcast %cst_6 : f32 to vector<10x128xf32>
    %20 = arith.select %11, %16, %19 : vector<10x128xi1>, vector<10x128xf32>
    %cst_7 = arith.constant dense<0.000000e+00> : vector<128xf32>
    %21 = vector.multi_reduction <add>, %20, %cst_7 [0] : vector<10x128xf32> to vector<128xf32>
    %22 = vector.shape_cast %21 : vector<128xf32> to vector<1x128xf32>
    %cst_8 = arith.constant 0.000000e+00 : f32
    %23 = vector.broadcast %cst_8 : f32 to vector<10x128xf32>
    %24 = arith.select %11, %0, %23 : vector<10x128xi1>, vector<10x128xf32>
    %cst_9 = arith.constant dense<0.000000e+00> : vector<128xf32>
    %25 = vector.multi_reduction <add>, %24, %cst_9 [0] : vector<10x128xf32> to vector<128xf32>
    %26 = vector.shape_cast %25 : vector<128xf32> to vector<1x128xf32>
    %27 = arith.divf %22, %18 : vector<1x128xf32>
    %cst_10 = arith.constant 1.000000e+00 : f32
    %28 = vector.broadcast %cst_10 : f32 to vector<1x128xf32>
    %29 = arith.subf %28, %27 : vector<1x128xf32>
    %cst_11 = arith.constant 0.000000e+00 : f32
    %30 = vector.broadcast %cst_11 : f32 to vector<1x128xf32>
    %31 = arith.maximumf %29, %30 : vector<1x128xf32>
    %cst_12 = arith.constant 2.000000e+00 : f32
    %32 = vector.broadcast %cst_12 : f32 to vector<1x128xf32>
    %33 = arith.mulf %32, %31 : vector<1x128xf32>
    %34 = math.log %18 : vector<1x128xf32>
    %35 = arith.addf %13, %34 : vector<1x128xf32>
    %36 = arith.subf %35, %26 : vector<1x128xf32>
    %37 = arith.mulf %33, %2 : vector<1x128xf32>
    %cst_13 = arith.constant 1.000000e-03 : f32
    %38 = vector.broadcast %cst_13 : f32 to vector<1x128xf32>
    %39 = arith.addf %37, %38 : vector<1x128xf32>
    %cst_14 = arith.constant 1.000000e+04 : f32
    %40 = vector.broadcast %cst_14 : f32 to vector<1x128xf32>
    %41 = arith.divf %40, %39 : vector<1x128xf32>
    %42 = arith.mulf %36, %41 : vector<1x128xf32>
    %cst_15 = arith.constant 0.000000e+00 : f32
    %43 = vector.broadcast %cst_15 : f32 to vector<1x128xf32>
    %44 = arith.select %8, %42, %43 : vector<1x128xi1>, vector<1x128xf32>
    %45 = vector.shape_cast %44 : vector<1x128xf32> to vector<1x1x128xf32>
    %cst_16 = arith.constant dense<0.000000e+00> : vector<1xf32>
    %46 = vector.multi_reduction <add>, %45, %cst_16 [1, 2] : vector<1x1x128xf32> to vector<1xf32>
    %47 = vector.shape_cast %46 : vector<1xf32> to vector<1x1x1xf32>
    %48 = vector.extract %47[0, 0, 0] : f32 from vector<1x1x1xf32>
    %49 = tpu.iota {dimensions = array<i32: 0>} : vector<8x128xi32>
    %50 = tpu.iota {dimensions = array<i32: 1>} : vector<8x128xi32>
    %c0_i32 = arith.constant 0 : i32
    %51 = vector.broadcast %c0_i32 : i32 to vector<8x128xi32>
    %52 = arith.cmpi eq, %49, %51 : vector<8x128xi32>
    %c0_i32_17 = arith.constant 0 : i32
    %53 = vector.broadcast %c0_i32_17 : i32 to vector<8x128xi32>
    %54 = arith.cmpi eq, %50, %53 : vector<8x128xi32>
    %55 = arith.andi %52, %54 : vector<8x128xi1>
    %cst_18 = arith.constant 0.000000e+00 : f32
    %56 = vector.broadcast %48 : f32 to vector<8x128xf32>
    %57 = vector.broadcast %cst_18 : f32 to vector<8x128xf32>
    %58 = arith.select %55, %56, %57 : vector<8x128xi1>, vector<8x128xf32>
    %c0_19 = arith.constant 0 : index
    %c0_20 = arith.constant 0 : index
    %59 = vector.load %arg4[%c0_19, %c0_20] : memref<8x128xf32, #tpu.memory_space<vmem>>, vector<8x128xf32>
    tpu.vector_store %arg4[%c0_19, %c0_20], %58 {strides = array<i32>} : memref<8x128xf32, #tpu.memory_space<vmem>>, vector<8x128xf32>,
    return
  }
  func.func @transform_0(%arg0: i32) -> (i32, i32) {
    %c0_i32 = arith.constant 0 : i32
    %c0_i32_0 = arith.constant 0 : i32
    return %c0_i32, %arg0 : i32, i32
  }
  func.func @transform_1(%arg0: i32) -> (i32, i32) {
    %c0_i32 = arith.constant 0 : i32
    %c0_i32_0 = arith.constant 0 : i32
    return %c0_i32, %arg0 : i32, i32
  }
  func.func @transform_2(%arg0: i32) -> (i32, i32) {
    %c0_i32 = arith.constant 0 : i32
    %c0_i32_0 = arith.constant 0 : i32
    return %c0_i32, %arg0 : i32, i32
  }
  func.func @transform_3(%arg0: i32) -> (i32, i32) {
    %c0_i32 = arith.constant 0 : i32
    %c0_i32_0 = arith.constant 0 : i32
    return %c0_i32, %arg0 : i32, i32
  }
}

</mosaic_0001>

<llo_original>
// kernel: tpu_custom_call.1
$region0: #{tpu_custom_call.1}
  #allocation0 [shape = 'u32[]', space=smem, size = 0x4, offset = 0x4, fixed_abs, tag = 'smem constant byte address 0x4 - core index']
  #allocation1 [shape = 'u32[144,128]{1,0:T(1,128)}', space=vmem, size = 0x12000, scoped, tag = 'internal scratch']
  %s0 = inlined_call_operand.vmem [shape: f32[200,10], index: 0, kind: input, shape index: {}]
  %s1 = inlined_call_operand.vmem [shape: s32[1,200], index: 1, kind: input, shape index: {}]
  %s2 = inlined_call_operand.vmem [shape: f32[1,200], index: 2, kind: input, shape index: {}]
  %s3 = inlined_call_operand.hbm [shape: f32[8,256], index: 3, kind: output, shape index: {}]
  %s4 = sld [smem:[#allocation0]]
  $region45: #{tpu_custom_call.1} parent=0
    _
  %s6 = ssub.s32 1, %s4
  %s7 = scalar_select 0, %s6, %s4
  $region1: #{tpu_custom_call.1} parent=0
    #allocation2 [shape = 'u8[8192]{0}', space=vmem, size = 0x2000, scoped, tag = 'output window, operand 0']
    #allocation3 [shape = 's32[2]{0}', space=sflag, size = 0x8, scoped, tag = 'scoped memory for tpu_custom_call.1']
    %8 = vsyncpa [#allocation3], 0
    %s9 = scalar_lea.sflag [#allocation3], 1
    %10 = vsyncpa %s9, 0
    loop: start=0, step=1, limit=4
    $region2: #{tpu_custom_call.1} parent=1 // loop_pre_header
      _
    $region3: #{tpu_custom_call.1} parent=1 // loop_header
      %s12 = sphi 0, %s16
      %p13 = scmp.ge.s32.totalorder %s12, 4
      %s22 = sphi 0, %s24
      %s25 = sphi 0, %s22
      %s26 = sphi 0, %s25
      %s42 = sphi 0, %s26
      %s48 = sphi 0, %s50
      %s51 = sphi 0, %s48
      %s52 = sphi 0, %s51
      %s68 = sphi 0, %s52
      %s74 = sphi 0, %s76
      %s77 = sphi 0, %s74
      %s78 = sphi 0, %s77
      %s94 = sphi 0, %s78
      %s100 = sphi 0, %s102
      %s103 = sphi 0, %s100
      %s104 = sphi 0, %s103
      %s120 = sphi 0, %s104
    $region4: #{tpu_custom_call.1} parent=1 // loop_header_branch
      %15 = sbr.rel (%p13) target = $region8
    $region5: #{tpu_custom_call.1} parent=1 // loop_body
      %s17 = ssub.s32 %s12, 1
      %s18 = ssub.s32 %s12, 2
      %s19 = sadd.s32 %s12, 1
      %s20 = ssub.s32 %s12, %s19
      %p21 = scmp.eq.s32.totalorder %s20, 0
      %s23 = sadd.s32 %s22, 1
      %s24 = scalar_select %p21, %s22, %s23
      %p27 = pneg %p21
      %p28 = scmp.eq.s32.totalorder %s12, 1
      %p29 = por %p27, %p28
      %p30 = scmp.ne.s32.totalorder %s22, %s25
      %p31 = scmp.eq.s32.totalorder %s12, 0
      %p32 = por %p30, %p31
      %p33 = scmp.ne.s32.totalorder %s22, %s25
      %p34 = scmp.eq.s32.totalorder %s17, 1
      %p35 = por %p33, %p34
      %p36 = scmp.ne.s32.totalorder %s25, %s26
      %p37 = scmp.eq.s32.totalorder %s17, 0
      %p38 = por %p36, %p37
      %p39 = scmp.ne.s32.totalorder %s25, %s26
      %p40 = scmp.eq.s32.totalorder %s18, 1
      %p41 = por %p39, %p40
      %p43 = scmp.ne.s32.totalorder %s26, %s42
      %p44 = scmp.eq.s32.totalorder %s18, 0
      %p45 = por %p43, %p44
      %s46 = ssub.s32 %s12, %s19
      %p47 = scmp.eq.s32.totalorder %s46, 0
      %s49 = sadd.s32 %s48, 1
      %s50 = scalar_select %p47, %s48, %s49
      %p53 = pneg %p47
      %p54 = scmp.eq.s32.totalorder %s12, 1
      %p55 = por %p53, %p54
      %p56 = scmp.ne.s32.totalorder %s48, %s51
      %p57 = scmp.eq.s32.totalorder %s12, 0
      %p58 = por %p56, %p57
      %p59 = scmp.ne.s32.totalorder %s48, %s51
      %p60 = scmp.eq.s32.totalorder %s17, 1
      %p61 = por %p59, %p60
      %p62 = scmp.ne.s32.totalorder %s51, %s52
      %p63 = scmp.eq.s32.totalorder %s17, 0
      %p64 = por %p62, %p63
      %p65 = scmp.ne.s32.totalorder %s51, %s52
      %p66 = scmp.eq.s32.totalorder %s18, 1
      %p67 = por %p65, %p66
      %p69 = scmp.ne.s32.totalorder %s52, %s68
      %p70 = scmp.eq.s32.totalorder %s18, 0
      %p71 = por %p69, %p70
      %s72 = ssub.s32 %s12, %s19
      %p73 = scmp.eq.s32.totalorder %s72, 0
      %s75 = sadd.s32 %s74, 1
      %s76 = scalar_select %p73, %s74, %s75
      %p79 = pneg %p73
      %p80 = scmp.eq.s32.totalorder %s12, 1
      %p81 = por %p79, %p80
      %p82 = scmp.ne.s32.totalorder %s74, %s77
      %p83 = scmp.eq.s32.totalorder %s12, 0
      %p84 = por %p82, %p83
      %p85 = scmp.ne.s32.totalorder %s74, %s77
      %p86 = scmp.eq.s32.totalorder %s17, 1
      %p87 = por %p85, %p86
      %p88 = scmp.ne.s32.totalorder %s77, %s78
      %p89 = scmp.eq.s32.totalorder %s17, 0
      %p90 = por %p88, %p89
      %p91 = scmp.ne.s32.totalorder %s77, %s78
      %p92 = scmp.eq.s32.totalorder %s18, 1
      %p93 = por %p91, %p92
      %p95 = scmp.ne.s32.totalorder %s78, %s94
      %p96 = scmp.eq.s32.totalorder %s18, 0
      %p97 = por %p95, %p96
      %s98 = ssub.s32 %s12, %s19
      %p99 = scmp.eq.s32.totalorder %s98, 0
      %s101 = sadd.s32 %s100, 1
      %s102 = scalar_select %p99, %s100, %s101
      %p105 = pneg %p99
      %p106 = scmp.eq.s32.totalorder %s12, 1
      %p107 = por %p105, %p106
      %p108 = scmp.ne.s32.totalorder %s100, %s103
      %p109 = scmp.eq.s32.totalorder %s12, 0
      %p110 = por %p108, %p109
      %p111 = scmp.ne.s32.totalorder %s100, %s103
      %p112 = scmp.eq.s32.totalorder %s17, 1
      %p113 = por %p111, %p112
      %p114 = scmp.ne.s32.totalorder %s103, %s104
      %p115 = scmp.eq.s32.totalorder %s17, 0
      %p116 = por %p114, %p115
      %p117 = scmp.ne.s32.totalorder %s103, %s104
      %p118 = scmp.eq.s32.totalorder %s18, 1
      %p119 = por %p117, %p118
      %p121 = scmp.ne.s32.totalorder %s104, %s120
      %p122 = scmp.eq.s32.totalorder %s18, 0
      %p123 = por %p121, %p122
      %p124 = scmp.le.s32.totalorder 1, %s12
      %p125 = scmp.lt.s32.totalorder %s12, 3
      %p126 = pnand %p124, %p125
      %p127 = pneg %p126
      // Predicated region
      $region9: #{tpu_custom_call.1} parent=5 // pred_check
        _
      $region10: #{tpu_custom_call.1} parent=5 // pred_check_branch
        %129 = sbr.rel (%p126) target = $region12
      $region11: #{tpu_custom_call.1} parent=5 // pred_region
        %s130 = ssub.s32 %s12, 1
      $region12: #{tpu_custom_call.1} parent=5 // pred_fallthru
        _
      %p131 = scmp.lt.s32.totalorder %s12, 2
      // Predicated region
      $region13: #{tpu_custom_call.1} parent=5 // pred_check
        %p132 = pneg %p131
      $region14: #{tpu_custom_call.1} parent=5 // pred_check_branch
        %134 = sbr.rel (%p132) target = $region16
      $region15: #{tpu_custom_call.1} parent=5 // pred_region
        // Predicated region
        $region17: #{tpu_custom_call.1} parent=15 // pred_check
          %p135 = pneg %p32
        $region18: #{tpu_custom_call.1} parent=15 // pred_check_branch
          %137 = sbr.rel (%p135) target = $region20
        $region19: #{tpu_custom_call.1} parent=15 // pred_region
          %s138 = smul.u32 16, %s12
          %s139 = ssub.s32 25, %s138
          %p140 = scmp.lt.s32.totalorder %s139, 16
          %s141 = scalar_select %p140, %s139, 16
          %s142 = smul.u32 128, %s141
          %p143 = scmp.lt.s32.totalorder %s138, 24
          %s144 = scalar_select %p143, %s138, 24
          %s145 = smul.addr %s144, 8
          %s146 = scalar_lea.vmem %s0, %s145
          %s147 = smul.u32 16, %s12
          %s148 = ssub.s32 25, %s147
          %p149 = scmp.lt.s32.totalorder %s148, 16
          %s150 = scalar_select %p149, %s148, 16
          %s151 = smul.u32 128, %s150
        $region20: #{tpu_custom_call.1} parent=15 // pred_fallthru
          _
        // Predicated region
        $region21: #{tpu_custom_call.1} parent=15 // pred_check
          %p152 = pneg %p58
        $region22: #{tpu_custom_call.1} parent=15 // pred_check_branch
          %154 = sbr.rel (%p152) target = $region24
        $region23: #{tpu_custom_call.1} parent=15 // pred_region
          %p155 = scmp.lt.s32.totalorder %s12, 1
          %s156 = scalar_select %p155, %s12, 1
          %s157 = scalar_lea.vmem %s1, %s156
        $region24: #{tpu_custom_call.1} parent=15 // pred_fallthru
          _
        // Predicated region
        $region25: #{tpu_custom_call.1} parent=15 // pred_check
          %p158 = pneg %p84
        $region26: #{tpu_custom_call.1} parent=15 // pred_check_branch
          %160 = sbr.rel (%p158) target = $region28
        $region27: #{tpu_custom_call.1} parent=15 // pred_region
          %p161 = scmp.lt.s32.totalorder %s12, 1
          %s162 = scalar_select %p161, %s12, 1
          %s163 = scalar_lea.vmem %s2, %s162
        $region28: #{tpu_custom_call.1} parent=15 // pred_fallthru
          _
      $region16: #{tpu_custom_call.1} parent=5 // pred_fallthru
        _
      %p164 = scmp.le.s32.totalorder 1, %s12
      %p165 = scmp.lt.s32.totalorder %s12, 3
      %p166 = pnand %p164, %p165
      %p167 = pneg %p166
      // Predicated region
      $region29: #{tpu_custom_call.1} parent=5 // pred_check
        _
      $region30: #{tpu_custom_call.1} parent=5 // pred_check_branch
        %169 = sbr.rel (%p166) target = $region32
      $region31: #{tpu_custom_call.1} parent=5 // pred_region
        %s170 = ssub.s32 %s12, 1
        %s171 = smul.u32 16, %s17
        %s172 = ssub.s32 25, %s171
        %p173 = scmp.lt.s32.totalorder %s172, 16
        %s174 = scalar_select %p173, %s172, 16
        %s175 = smul.u32 128, %s174
        %p176 = scmp.lt.s32.totalorder %s171, 24
        %s177 = scalar_select %p176, %s171, 24
        %s178 = smul.addr %s177, 8
        %s179 = scalar_lea.vmem %s0, %s178
        %p180 = pneg %p38
        %p181 = pneg %p35
        %p182 = scmp.lt.s32.totalorder %s17, 1
        %s183 = scalar_select %p182, %s17, 1
        %s184 = scalar_lea.vmem %s1, %s183
        %p185 = pneg %p64
        %p186 = pneg %p61
        %p187 = scmp.lt.s32.totalorder %s17, 1
        %s188 = scalar_select %p187, %s17, 1
        %s189 = scalar_lea.vmem %s2, %s188
        %p190 = pneg %p90
        %p191 = pneg %p87
        %p192 = pneg %p116
        %p193 = pneg %p113
        %s194 = sand.u32 %s103, 1
        %s195 = scalar_lea.sflag [#allocation3], %s194
        %s196 = sand.u32 %s103, 1
        %s197 = smul.addr %s196, 8
        %s198 = scalar_lea.vmem [#allocation2], %s197
        %s199 = smul.u32 16, %s17
        %s200 = ssub.s32 25, %s199
        %p201 = scmp.lt.s32.totalorder %s200, 16
        %s202 = scalar_select %p201, %s200, 16
        %s203 = smul.u32 128, %s202
        %p204 = scmp.lt.s32.totalorder %s199, 24
        %s205 = scalar_select %p204, %s199, 24
        %s206 = smul.addr %s205, 8
        %s207 = scalar_lea.vmem %s0, %s206
        %s208 = smul.u32 16, %s17
        %s209 = ssub.s32 25, %s208
        %p210 = scmp.lt.s32.totalorder %s209, 16
        %s211 = scalar_select %p210, %s209, 16
        %s212 = smul.u32 128, %s211
        %p213 = scmp.lt.s32.totalorder %s17, 1
        %s214 = scalar_select %p213, %s17, 1
        %s215 = scalar_lea.vmem %s1, %s214
        %p216 = scmp.lt.s32.totalorder %s17, 1
        %s217 = scalar_select %p216, %s17, 1
        %s218 = scalar_lea.vmem %s2, %s217
        %v219 = vld [vmem:[%s207] sm:$0xff]
        %v220 = vld [vmem:[%s207 + $0x8] sm:$0xff]
        %v221 = vld [vmem:[%s207 + $0x10] sm:$0xff]
        %v222 = vld [vmem:[%s207 + $0x18] sm:$0xff]
        %v223 = vld [vmem:[%s207 + $0x20] sm:$0xff]
        %v224 = vld [vmem:[%s207 + $0x28] sm:$0xff]
        %v225 = vld [vmem:[%s207 + $0x30] sm:$0xff]
        %v226 = vld [vmem:[%s207 + $0x38] sm:$0xff]
        %v227 = vld [vmem:[%s207 + $0x40] sm:$0xff]
        %v228 = vld [vmem:[%s207 + $0x48] sm:$0xff]
        %v229 = vld [vmem:[%s207 + $0x50] sm:$0xff]
        %v230 = vld [vmem:[%s207 + $0x58] sm:$0xff]
        %v231 = vld [vmem:[%s207 + $0x60] sm:$0xff]
        %v232 = vld [vmem:[%s207 + $0x68] sm:$0xff]
        %v233 = vld [vmem:[%s207 + $0x70] sm:$0xff]
        %v234 = vld [vmem:[%s207 + $0x78] sm:$0xff]
        %235 = vxpose.xlu0.b32.start [1/16] %v219, 128
        %236 = vxpose.xlu0.b32.cont [2/16] %v220, 128
        %237 = vxpose.xlu0.b32.cont [3/16] %v221, 128
        %238 = vxpose.xlu0.b32.cont [4/16] %v222, 128
        %239 = vxpose.xlu0.b32.cont [5/16] %v223, 128
        %240 = vxpose.xlu0.b32.cont [6/16] %v224, 128
        %241 = vxpose.xlu0.b32.cont [7/16] %v225, 128
        %242 = vxpose.xlu0.b32.cont [8/16] %v226, 128
        %243 = vxpose.xlu0.b32.cont [9/16] %v227, 128
        %244 = vxpose.xlu0.b32.cont [10/16] %v228, 128
        %245 = vxpose.xlu0.b32.cont [11/16] %v229, 128
        %246 = vxpose.xlu0.b32.cont [12/16] %v230, 128
        %247 = vxpose.xlu0.b32.cont [13/16] %v231, 128
        %248 = vxpose.xlu0.b32.cont [14/16] %v232, 128
        %249 = vxpose.xlu0.b32.cont [15/16] %v233, 128
        %250 = vxpose.xlu0.b32.end [16/16] %v234, 128
        %v251 = vpop.trf.xlu0
        %v252 = vpop.trf.xlu0
        %v253 = vpop.trf.xlu0
        %v254 = vpop.trf.xlu0
        %v255 = vpop.trf.xlu0
        %v256 = vpop.trf.xlu0
        %v257 = vpop.trf.xlu0
        %v258 = vpop.trf.xlu0
        %v259 = vpop.trf.xlu0
        %v260 = vpop.trf.xlu0
        %v261 = vpop.trf.xlu0
        %v262 = vpop.trf.xlu0
        %v263 = vpop.trf.xlu0
        %v264 = vpop.trf.xlu0
        %v265 = vpop.trf.xlu0
        %v266 = vpop.trf.xlu0
        %v267 = vld [vmem:[%s215] sm:$0x1]
        %v268 = vld [vmem:[%s218] sm:$0x1]
        %v269 = vlaneseq
        %v270 = vand.u32 %v269, 127
        %s271 = smul.u32 %s17, 128
        %v272 = vstv %s271
        %v273 = vadd.s32 %v270, %v272
        %vm274 = vcmp.lt.s32.totalorder %v273, 200
        %v275 = vlaneseq
        %v276 = vshrl.u32 %v275, 7
        %v277 = vadd.s32 %v276, 8
        %v278 = vlaneseq
        %v279 = vshrl.u32 %v278, 7
        %v280 = vsub.s32 0, %v279
        %v281 = vrot.slane %v267, %v280
        %vm282 = vcmp.eq.s32.totalorder %v276, %v281
        %vm283 = vcmp.eq.s32.totalorder %v277, %v281
        %vm284 = vcmask 1041408
        %v285 = vsel %vm284, %v252, -inf
        %v286 = vmax.f32 %v251, %v285
        %v287 = vrot.slane %v286, 4
        %v288 = vmax.f32 %v286, %v287
        %v289 = vrot.slane %v288, 2
        %v290 = vmax.f32 %v288, %v289
        %v291 = vrot.slane %v290, 1
        %v292 = vmax.f32 %v290, %v291
        %v293 = vsub.f32 %v251, %v292
        %v294 = vsub.f32 %v252, %v292
        %v295 = vmul.f32 %v293, 1.442695
        %v296 = vpow.pop %v295
        %v297 = vmul.f32 %v294, 1.442695
        %v298 = vpow.pop %v297
        %v299 = vsel %vm284, %v298, 0.0
        %v300 = vadd.f32 %v296, %v299
        %v301 = vrot.slane %v300, 4
        %v302 = vadd.f32 %v300, %v301
        %v303 = vrot.slane %v302, 2
        %v304 = vadd.f32 %v302, %v303
        %v305 = vrot.slane %v304, 1
        %v306 = vadd.f32 %v304, %v305
        %v307 = vsel %vm282, %v296, 0.0
        %v308 = vsel %vm283, %v298, 0.0
        %v309 = vsel %vm284, %v308, 0.0
        %v310 = vadd.f32 %v307, %v309
        %v311 = vrot.slane %v310, 4
        %v312 = vadd.f32 %v310, %v311
        %v313 = vrot.slane %v312, 2
        %v314 = vadd.f32 %v312, %v313
        %v315 = vrot.slane %v314, 1
        %v316 = vadd.f32 %v314, %v315
        %v317 = vsel %vm282, %v251, 0.0
        %v318 = vsel %vm283, %v252, 0.0
        %v319 = vsel %vm284, %v318, 0.0
        %v320 = vadd.f32 %v317, %v319
        %v321 = vrot.slane %v320, 4
        %v322 = vadd.f32 %v320, %v321
        %v323 = vrot.slane %v322, 2
        %v324 = vadd.f32 %v322, %v323
        %v325 = vrot.slane %v324, 1
        %v326 = vadd.f32 %v324, %v325
        %v327 = vrcp.pop %v306
        %v328 = vmul.f32 %v316, %v327
        %v329 = vsub.f32 1.0, %v328
        %v330 = vmax.f32 %v329, 0.0
        %v331 = vmul.f32 %v330, 2.0
        %v332 = vlog2.pop %v306
        %v333 = vmul.f32 %v332, 0.6931472
        %v334 = vadd.f32 %v292, %v333
        %v335 = vsub.f32 %v334, %v326
        %v336 = vmul.f32 %v331, %v268
        %v337 = vadd.f32 %v336, 0.001
        %v338 = vrcp.pop %v337
        %v339 = vmul.f32 10000.0, %v338
        %v340 = vmul.f32 %v335, %v339
        %v341 = vsel %vm274, %v340, 0.0
        %vm342 = vcmask 1040384
        %v343 = vsel %vm342, %v341, 0.0
        %344 = vadd.xlane.f32.xlu0 %v343
        %v345 = vpop.xlane.xlu0 %344
        %v346 = vrot.slane %v345, 4
        %v347 = vadd.f32 %v345, %v346
        %v348 = vrot.slane %v347, 2
        %v349 = vadd.f32 %v347, %v348
        %v350 = vrot.slane %v349, 1
        %v351 = vadd.f32 %v349, %v350
        %s352 = vtos %v351
        %vm353 = vcmp.eq.s32.totalorder %v276, 0
        %vm354 = vcmp.eq.s32.totalorder %v270, 0
        %vm355 = vmand %vm353, %vm354
        %v356 = vstv %s352
        %v357 = vsel %vm355, %v356, 0.0
        %358 = vst [vmem:[%s198] sm:$0xff] %v357
        %s359 = sand.u32 %s103, 1
        %s360 = scalar_lea.sflag [#allocation3], %s359
        %s361 = sand.u32 %s103, 1
        %s362 = smul.addr %s361, 8
        %s363 = scalar_lea.vmem [#allocation2], %s362
        // Predicated region
        $region33: #{tpu_custom_call.1} parent=31 // pred_check
          %p364 = pneg %p113
        $region34: #{tpu_custom_call.1} parent=31 // pred_check_branch
          %366 = sbr.rel (%p364) target = $region36
        $region35: #{tpu_custom_call.1} parent=31 // pred_region
          %s368 = ssub.s32 128, 128
          %369 = vsyncadd %s360, %s368
          %s370 = smul.addr %s17, 128
          %s371 = scalar_lea.hbm %s3, %s370
          %s373 = sshll.u32 %s363, 4
          %s374 = int_to_ptr.vmem [resolvable:$true] %s373
          %376 = dma.vmem_to_hbm [thread:$0]  %s374, 128, %s371, %s360
        $region36: #{tpu_custom_call.1} parent=31 // pred_fallthru
          _
      $region32: #{tpu_custom_call.1} parent=5 // pred_fallthru
        _
      %p377 = scmp.le.s32.totalorder 2, %s12
      // Predicated region
      $region37: #{tpu_custom_call.1} parent=5 // pred_check
        %p378 = pneg %p377
      $region38: #{tpu_custom_call.1} parent=5 // pred_check_branch
        %380 = sbr.rel (%p378) target = $region40
      $region39: #{tpu_custom_call.1} parent=5 // pred_region
        %s381 = ssub.s32 %s12, 2
        // Predicated region
        $region41: #{tpu_custom_call.1} parent=39 // pred_check
          %p382 = pneg %p119
        $region42: #{tpu_custom_call.1} parent=39 // pred_check_branch
          %384 = sbr.rel (%p382) target = $region44
        $region43: #{tpu_custom_call.1} parent=39 // pred_region
          %s385 = sand.u32 %s104, 1
          %s386 = scalar_lea.sflag [#allocation3], %s385
          %s387 = sand.u32 %s104, 1
          %s388 = smul.addr %s387, 8
          %s389 = scalar_lea.vmem [#allocation2], %s388
          %390 = dma.done %s386, 128
        $region44: #{tpu_custom_call.1} parent=39 // pred_fallthru
          _
      $region40: #{tpu_custom_call.1} parent=5 // pred_fallthru
        _
    $region6: #{tpu_custom_call.1} parent=1 // loop_footer
      %s16 = sadd.s32 1, %s12
    $region7: #{tpu_custom_call.1} parent=1 // loop_footer_branch
      %11 = sbr.rel target = $region3
    $region8: #{tpu_custom_call.1} parent=1 // loop_exit
      _
    %391 = vsyncpa [#allocation3], 1
    %s392 = scalar_lea.sflag [#allocation3], 1
    %393 = vsyncpa %s392, 1

// kernel: tpu_custom_call.1
$region0: #{tpu_custom_call.1}
  #allocation0 [shape = 'u32[]', space=smem, size = 0x4, offset = 0x4, fixed_abs, tag = 'smem constant byte address 0x4 - core index']
  #allocation1 [shape = 'u32[144,128]{1,0:T(1,128)}', space=vmem, size = 0x12000, scoped, tag = 'internal scratch']
  %s0 = inlined_call_operand.hbm [shape: f32[10,200], index: 0, kind: input, shape index: {}]
  %s1 = inlined_call_operand.vmem [shape: s32[1,200], index: 1, kind: input, shape index: {}]
  %s2 = inlined_call_operand.vmem [shape: f32[1,200], index: 2, kind: input, shape index: {}]
  %s3 = inlined_call_operand.hbm [shape: f32[8,256], index: 3, kind: output, shape index: {}]
  %s4 = sld [smem:[#allocation0]]
  $region49: #{tpu_custom_call.1} parent=0
    _
  %s6 = ssub.s32 1, %s4
  %s7 = scalar_select 0, %s6, %s4
  $region1: #{tpu_custom_call.1} parent=0
    #allocation2 [shape = 'u8[16384]{0}', space=vmem, size = 0x4000, scoped, tag = 'input window, operand 0']
    #allocation3 [shape = 's32[2]{0}', space=sflag, size = 0x8, scoped, tag = 'scoped memory for tpu_custom_call.1']
    #allocation4 [shape = 's32[2]{0}', space=sflag, size = 0x8, scoped, tag = 'scoped memory for tpu_custom_call.1']
    #allocation5 [shape = 'u8[8192]{0}', space=vmem, size = 0x2000, scoped, tag = 'output window, operand 0']
    %8 = vsyncpa [#allocation3], 0
    %s9 = scalar_lea.sflag [#allocation3], 1
    %10 = vsyncpa %s9, 0
    %11 = vsyncpa [#allocation4], 0
    %s12 = scalar_lea.sflag [#allocation4], 1
    %13 = vsyncpa %s12, 0
    loop: start=0, step=1, limit=4
    $region2: #{tpu_custom_call.1} parent=1 // loop_pre_header
      _
    $region3: #{tpu_custom_call.1} parent=1 // loop_header
      %s15 = sphi 0, %s19
      %p16 = scmp.ge.s32.totalorder %s15, 4
      %s25 = sphi 0, %s27
      %s28 = sphi 0, %s25
      %s29 = sphi 0, %s28
      %s45 = sphi 0, %s29
      %s51 = sphi 0, %s53
      %s54 = sphi 0, %s51
      %s55 = sphi 0, %s54
      %s71 = sphi 0, %s55
      %s77 = sphi 0, %s79
      %s80 = sphi 0, %s77
      %s81 = sphi 0, %s80
      %s97 = sphi 0, %s81
      %s103 = sphi 0, %s105
      %s106 = sphi 0, %s103
      %s107 = sphi 0, %s106
      %s123 = sphi 0, %s107
    $region4: #{tpu_custom_call.1} parent=1 // loop_header_branch
      %18 = sbr.rel (%p16) target = $region8
    $region5: #{tpu_custom_call.1} parent=1 // loop_body
      %s20 = ssub.s32 %s15, 1
      %s21 = ssub.s32 %s15, 2
      %s22 = sadd.s32 %s15, 1
      %s23 = ssub.s32 %s15, %s22
      %p24 = scmp.eq.s32.totalorder %s23, 0
      %s26 = sadd.s32 %s25, 1
      %s27 = scalar_select %p24, %s25, %s26
      %p30 = pneg %p24
      %p31 = scmp.eq.s32.totalorder %s15, 1
      %p32 = por %p30, %p31
      %p33 = scmp.ne.s32.totalorder %s25, %s28
      %p34 = scmp.eq.s32.totalorder %s15, 0
      %p35 = por %p33, %p34
      %p36 = scmp.ne.s32.totalorder %s25, %s28
      %p37 = scmp.eq.s32.totalorder %s20, 1
      %p38 = por %p36, %p37
      %p39 = scmp.ne.s32.totalorder %s28, %s29
      %p40 = scmp.eq.s32.totalorder %s20, 0
      %p41 = por %p39, %p40
      %p42 = scmp.ne.s32.totalorder %s28, %s29
      %p43 = scmp.eq.s32.totalorder %s21, 1
      %p44 = por %p42, %p43
      %p46 = scmp.ne.s32.totalorder %s29, %s45
      %p47 = scmp.eq.s32.totalorder %s21, 0
      %p48 = por %p46, %p47
      %s49 = ssub.s32 %s15, %s22
      %p50 = scmp.eq.s32.totalorder %s49, 0
      %s52 = sadd.s32 %s51, 1
      %s53 = scalar_select %p50, %s51, %s52
      %p56 = pneg %p50
      %p57 = scmp.eq.s32.totalorder %s15, 1
      %p58 = por %p56, %p57
      %p59 = scmp.ne.s32.totalorder %s51, %s54
      %p60 = scmp.eq.s32.totalorder %s15, 0
      %p61 = por %p59, %p60
      %p62 = scmp.ne.s32.totalorder %s51, %s54
      %p63 = scmp.eq.s32.totalorder %s20, 1
      %p64 = por %p62, %p63
      %p65 = scmp.ne.s32.totalorder %s54, %s55
      %p66 = scmp.eq.s32.totalorder %s20, 0
      %p67 = por %p65, %p66
      %p68 = scmp.ne.s32.totalorder %s54, %s55
      %p69 = scmp.eq.s32.totalorder %s21, 1
      %p70 = por %p68, %p69
      %p72 = scmp.ne.s32.totalorder %s55, %s71
      %p73 = scmp.eq.s32.totalorder %s21, 0
      %p74 = por %p72, %p73
      %s75 = ssub.s32 %s15, %s22
      %p76 = scmp.eq.s32.totalorder %s75, 0
      %s78 = sadd.s32 %s77, 1
      %s79 = scalar_select %p76, %s77, %s78
      %p82 = pneg %p76
      %p83 = scmp.eq.s32.totalorder %s15, 1
      %p84 = por %p82, %p83
      %p85 = scmp.ne.s32.totalorder %s77, %s80
      %p86 = scmp.eq.s32.totalorder %s15, 0
      %p87 = por %p85, %p86
      %p88 = scmp.ne.s32.totalorder %s77, %s80
      %p89 = scmp.eq.s32.totalorder %s20, 1
      %p90 = por %p88, %p89
      %p91 = scmp.ne.s32.totalorder %s80, %s81
      %p92 = scmp.eq.s32.totalorder %s20, 0
      %p93 = por %p91, %p92
      %p94 = scmp.ne.s32.totalorder %s80, %s81
      %p95 = scmp.eq.s32.totalorder %s21, 1
      %p96 = por %p94, %p95
      %p98 = scmp.ne.s32.totalorder %s81, %s97
      %p99 = scmp.eq.s32.totalorder %s21, 0
      %p100 = por %p98, %p99
      %s101 = ssub.s32 %s15, %s22
      %p102 = scmp.eq.s32.totalorder %s101, 0
      %s104 = sadd.s32 %s103, 1
      %s105 = scalar_select %p102, %s103, %s104
      %p108 = pneg %p102
      %p109 = scmp.eq.s32.totalorder %s15, 1
      %p110 = por %p108, %p109
      %p111 = scmp.ne.s32.totalorder %s103, %s106
      %p112 = scmp.eq.s32.totalorder %s15, 0
      %p113 = por %p111, %p112
      %p114 = scmp.ne.s32.totalorder %s103, %s106
      %p115 = scmp.eq.s32.totalorder %s20, 1
      %p116 = por %p114, %p115
      %p117 = scmp.ne.s32.totalorder %s106, %s107
      %p118 = scmp.eq.s32.totalorder %s20, 0
      %p119 = por %p117, %p118
      %p120 = scmp.ne.s32.totalorder %s106, %s107
      %p121 = scmp.eq.s32.totalorder %s21, 1
      %p122 = por %p120, %p121
      %p124 = scmp.ne.s32.totalorder %s107, %s123
      %p125 = scmp.eq.s32.totalorder %s21, 0
      %p126 = por %p124, %p125
      %p127 = scmp.le.s32.totalorder 1, %s15
      %p128 = scmp.lt.s32.totalorder %s15, 3
      %p129 = pnand %p127, %p128
      %p130 = pneg %p129
      // Predicated region
      $region9: #{tpu_custom_call.1} parent=5 // pred_check
        _
      $region10: #{tpu_custom_call.1} parent=5 // pred_check_branch
        %132 = sbr.rel (%p129) target = $region12
      $region11: #{tpu_custom_call.1} parent=5 // pred_region
        %s133 = ssub.s32 %s15, 1
      $region12: #{tpu_custom_call.1} parent=5 // pred_fallthru
        _
      %p134 = scmp.lt.s32.totalorder %s15, 2
      // Predicated region
      $region13: #{tpu_custom_call.1} parent=5 // pred_check
        %p135 = pneg %p134
      $region14: #{tpu_custom_call.1} parent=5 // pred_check_branch
        %137 = sbr.rel (%p135) target = $region16
      $region15: #{tpu_custom_call.1} parent=5 // pred_region
        // Predicated region
        $region17: #{tpu_custom_call.1} parent=15 // pred_check
          %p138 = pneg %p35
        $region18: #{tpu_custom_call.1} parent=15 // pred_check_branch
          %140 = sbr.rel (%p138) target = $region20
        $region19: #{tpu_custom_call.1} parent=15 // pred_region
          %s141 = sand.u32 %s25, 1
          %s142 = scalar_lea.sflag [#allocation3], %s141
          %s143 = sand.u32 %s25, 1
          %s144 = smul.addr %s143, 16
          %s145 = scalar_lea.vmem [#allocation2], %s144
          %s147 = ssub.s32 256, 256
          %148 = vsyncadd %s142, %s147
          %s149 = smul.addr %s15, 128
          %s150 = scalar_lea.hbm %s0, %s149
          %s151 = sshll.u32 %s145, 4
          %s152 = int_to_ptr.vmem [resolvable:$true] %s151
          %157 = dma.hbm_to_vmem [thread:$0]  %s150, 256, %s152, %s142, 256, 128, 8
        $region20: #{tpu_custom_call.1} parent=15 // pred_fallthru
          _
        // Predicated region
        $region21: #{tpu_custom_call.1} parent=15 // pred_check
          %p158 = pneg %p61
        $region22: #{tpu_custom_call.1} parent=15 // pred_check_branch
          %160 = sbr.rel (%p158) target = $region24
        $region23: #{tpu_custom_call.1} parent=15 // pred_region
          %p161 = scmp.lt.s32.totalorder %s15, 1
          %s162 = scalar_select %p161, %s15, 1
          %s163 = scalar_lea.vmem %s1, %s162
        $region24: #{tpu_custom_call.1} parent=15 // pred_fallthru
          _
        // Predicated region
        $region25: #{tpu_custom_call.1} parent=15 // pred_check
          %p164 = pneg %p87
        $region26: #{tpu_custom_call.1} parent=15 // pred_check_branch
          %166 = sbr.rel (%p164) target = $region28
        $region27: #{tpu_custom_call.1} parent=15 // pred_region
          %p167 = scmp.lt.s32.totalorder %s15, 1
          %s168 = scalar_select %p167, %s15, 1
          %s169 = scalar_lea.vmem %s2, %s168
        $region28: #{tpu_custom_call.1} parent=15 // pred_fallthru
          _
      $region16: #{tpu_custom_call.1} parent=5 // pred_fallthru
        _
      %p170 = scmp.le.s32.totalorder 1, %s15
      %p171 = scmp.lt.s32.totalorder %s15, 3
      %p172 = pnand %p170, %p171
      %p173 = pneg %p172
      // Predicated region
      $region29: #{tpu_custom_call.1} parent=5 // pred_check
        _
      $region30: #{tpu_custom_call.1} parent=5 // pred_check_branch
        %175 = sbr.rel (%p172) target = $region32
      $region31: #{tpu_custom_call.1} parent=5 // pred_region
        %s176 = ssub.s32 %s15, 1
        %s177 = sand.u32 %s28, 1
        %s178 = scalar_lea.sflag [#allocation3], %s177
        %s179 = sand.u32 %s28, 1
        %s180 = smul.addr %s179, 16
        %s181 = scalar_lea.vmem [#allocation2], %s180
        // Predicated region
        $region33: #{tpu_custom_call.1} parent=31 // pred_check
          %p182 = pneg %p41
        $region34: #{tpu_custom_call.1} parent=31 // pred_check_branch
          %184 = sbr.rel (%p182) target = $region36
        $region35: #{tpu_custom_call.1} parent=31 // pred_region
          %185 = dma.done %s178, 256
        $region36: #{tpu_custom_call.1} parent=31 // pred_fallthru
          _
        %s186 = sand.u32 %s28, 1
        %s187 = scalar_lea.sflag [#allocation3], %s186
        %s188 = sand.u32 %s28, 1
        %s189 = smul.addr %s188, 16
        %s190 = scalar_lea.vmem [#allocation2], %s189
        %p191 = pneg %p41
        %p192 = pneg %p38
        %p193 = scmp.lt.s32.totalorder %s20, 1
        %s194 = scalar_select %p193, %s20, 1
        %s195 = scalar_lea.vmem %s1, %s194
        %p196 = pneg %p67
        %p197 = pneg %p64
        %p198 = scmp.lt.s32.totalorder %s20, 1
        %s199 = scalar_select %p198, %s20, 1
        %s200 = scalar_lea.vmem %s2, %s199
        %p201 = pneg %p93
        %p202 = pneg %p90
        %p203 = pneg %p119
        %p204 = pneg %p116
        %s205 = sand.u32 %s106, 1
        %s206 = scalar_lea.sflag [#allocation4], %s205
        %s207 = sand.u32 %s106, 1
        %s208 = smul.addr %s207, 8
        %s209 = scalar_lea.vmem [#allocation5], %s208
        %p210 = scmp.lt.s32.totalorder %s20, 1
        %s211 = scalar_select %p210, %s20, 1
        %s212 = scalar_lea.vmem %s1, %s211
        %p213 = scmp.lt.s32.totalorder %s20, 1
        %s214 = scalar_select %p213, %s20, 1
        %s215 = scalar_lea.vmem %s2, %s214
        %v216 = vld [vmem:[%s181] sm:$0xff]
        %v217 = vld [vmem:[%s181 + $0x8] sm:$0x3]
        %v218 = vld [vmem:[%s212] sm:$0x1]
        %v219 = vld [vmem:[%s215] sm:$0x1]
        %v220 = vlaneseq
        %v221 = vand.u32 %v220, 127
        %s222 = smul.u32 %s20, 128
        %v223 = vstv %s222
        %v224 = vadd.s32 %v221, %v223
        %vm225 = vcmp.lt.s32.totalorder %v224, 200
        %v226 = vlaneseq
        %v227 = vshrl.u32 %v226, 7
        %v228 = vadd.s32 %v227, 8
        %v229 = vlaneseq
        %v230 = vshrl.u32 %v229, 7
        %v231 = vsub.s32 0, %v230
        %v232 = vrot.slane %v218, %v231
        %vm233 = vcmp.eq.s32.totalorder %v227, %v232
        %vm234 = vcmp.eq.s32.totalorder %v228, %v232
        %vm235 = vcmask 1041408
        %v236 = vsel %vm235, %v217, -inf
        %v237 = vmax.f32 %v216, %v236
        %v238 = vrot.slane %v237, 4
        %v239 = vmax.f32 %v237, %v238
        %v240 = vrot.slane %v239, 2
        %v241 = vmax.f32 %v239, %v240
        %v242 = vrot.slane %v241, 1
        %v243 = vmax.f32 %v241, %v242
        %v244 = vsub.f32 %v216, %v243
        %v245 = vsub.f32 %v217, %v243
        %v246 = vmul.f32 %v244, 1.442695
        %v247 = vpow.pop %v246
        %v248 = vmul.f32 %v245, 1.442695
        %v249 = vpow.pop %v248
        %v250 = vsel %vm235, %v249, 0.0
        %v251 = vadd.f32 %v247, %v250
        %v252 = vrot.slane %v251, 4
        %v253 = vadd.f32 %v251, %v252
        %v254 = vrot.slane %v253, 2
        %v255 = vadd.f32 %v253, %v254
        %v256 = vrot.slane %v255, 1
        %v257 = vadd.f32 %v255, %v256
        %v258 = vsel %vm233, %v247, 0.0
        %v259 = vsel %vm234, %v249, 0.0
        %v260 = vsel %vm235, %v259, 0.0
        %v261 = vadd.f32 %v258, %v260
        %v262 = vrot.slane %v261, 4
        %v263 = vadd.f32 %v261, %v262
        %v264 = vrot.slane %v263, 2
        %v265 = vadd.f32 %v263, %v264
        %v266 = vrot.slane %v265, 1
        %v267 = vadd.f32 %v265, %v266
        %v268 = vsel %vm233, %v216, 0.0
        %v269 = vsel %vm234, %v217, 0.0
        %v270 = vsel %vm235, %v269, 0.0
        %v271 = vadd.f32 %v268, %v270
        %v272 = vrot.slane %v271, 4
        %v273 = vadd.f32 %v271, %v272
        %v274 = vrot.slane %v273, 2
        %v275 = vadd.f32 %v273, %v274
        %v276 = vrot.slane %v275, 1
        %v277 = vadd.f32 %v275, %v276
        %v278 = vrcp.pop %v257
        %v279 = vmul.f32 %v267, %v278
        %v280 = vsub.f32 1.0, %v279
        %v281 = vmax.f32 %v280, 0.0
        %v282 = vmul.f32 %v281, 2.0
        %v283 = vlog2.pop %v257
        %v284 = vmul.f32 %v283, 0.6931472
        %v285 = vadd.f32 %v243, %v284
        %v286 = vsub.f32 %v285, %v277
        %v287 = vmul.f32 %v282, %v219
        %v288 = vadd.f32 %v287, 0.001
        %v289 = vrcp.pop %v288
        %v290 = vmul.f32 10000.0, %v289
        %v291 = vmul.f32 %v286, %v290
        %v292 = vsel %vm225, %v291, 0.0
        %vm293 = vcmask 1040384
        %v294 = vsel %vm293, %v292, 0.0
        %295 = vadd.xlane.f32.xlu0 %v294
        %v296 = vpop.xlane.xlu0 %295
        %v297 = vrot.slane %v296, 4
        %v298 = vadd.f32 %v296, %v297
        %v299 = vrot.slane %v298, 2
        %v300 = vadd.f32 %v298, %v299
        %v301 = vrot.slane %v300, 1
        %v302 = vadd.f32 %v300, %v301
        %s303 = vtos %v302
        %vm304 = vcmp.eq.s32.totalorder %v227, 0
        %vm305 = vcmp.eq.s32.totalorder %v221, 0
        %vm306 = vmand %vm304, %vm305
        %v307 = vstv %s303
        %v308 = vsel %vm306, %v307, 0.0
        %309 = vst [vmem:[%s209] sm:$0xff] %v308
        %s310 = sand.u32 %s106, 1
        %s311 = scalar_lea.sflag [#allocation4], %s310
        %s312 = sand.u32 %s106, 1
        %s313 = smul.addr %s312, 8
        %s314 = scalar_lea.vmem [#allocation5], %s313
        // Predicated region
        $region37: #{tpu_custom_call.1} parent=31 // pred_check
          %p315 = pneg %p116
        $region38: #{tpu_custom_call.1} parent=31 // pred_check_branch
          %317 = sbr.rel (%p315) target = $region40
        $region39: #{tpu_custom_call.1} parent=31 // pred_region
          %s319 = ssub.s32 128, 128
          %320 = vsyncadd %s311, %s319
          %s321 = smul.addr %s20, 128
          %s322 = scalar_lea.hbm %s3, %s321
          %s324 = sshll.u32 %s314, 4
          %s325 = int_to_ptr.vmem [resolvable:$true] %s324
          %327 = dma.vmem_to_hbm [thread:$0]  %s325, 128, %s322, %s311
        $region40: #{tpu_custom_call.1} parent=31 // pred_fallthru
          _
      $region32: #{tpu_custom_call.1} parent=5 // pred_fallthru
        _
      %p328 = scmp.le.s32.totalorder 2, %s15
      // Predicated region
      $region41: #{tpu_custom_call.1} parent=5 // pred_check
        %p329 = pneg %p328
      $region42: #{tpu_custom_call.1} parent=5 // pred_check_branch
        %331 = sbr.rel (%p329) target = $region44
      $region43: #{tpu_custom_call.1} parent=5 // pred_region
        %s332 = ssub.s32 %s15, 2
        // Predicated region
        $region45: #{tpu_custom_call.1} parent=43 // pred_check
          %p333 = pneg %p122
        $region46: #{tpu_custom_call.1} parent=43 // pred_check_branch
          %335 = sbr.rel (%p333) target = $region48
        $region47: #{tpu_custom_call.1} parent=43 // pred_region
          %s336 = sand.u32 %s107, 1
          %s337 = scalar_lea.sflag [#allocation4], %s336
          %s338 = sand.u32 %s107, 1
          %s339 = smul.addr %s338, 8
          %s340 = scalar_lea.vmem [#allocation5], %s339
          %341 = dma.done %s337, 128
        $region48: #{tpu_custom_call.1} parent=43 // pred_fallthru
          _
      $region44: #{tpu_custom_call.1} parent=5 // pred_fallthru
        _
    $region6: #{tpu_custom_call.1} parent=1 // loop_footer
      %s19 = sadd.s32 1, %s15
    $region7: #{tpu_custom_call.1} parent=1 // loop_footer_branch
      %14 = sbr.rel target = $region3
    $region8: #{tpu_custom_call.1} parent=1 // loop_exit
      _
    %342 = vsyncpa [#allocation3], 1
    %s343 = scalar_lea.sflag [#allocation3], 1
    %344 = vsyncpa %s343, 1
    %345 = vsyncpa [#allocation4], 1
    %s346 = scalar_lea.sflag [#allocation4], 1
    %347 = vsyncpa %s346, 1

</llo_original>
